<compile_context>
chip_gen: v7x
topology: tpu7x:2x2x1
jax: 0.10.0
libtpu: 0.0.40
codegen_flags: <defaults>
</compile_context>

<pallas_src>
import functools
import math

import jax
import jax.numpy as jnp
from jax import lax
from jax.experimental import pallas as pl
from jax.experimental.pallas import tpu as pltpu


def _tweedie_kernel(yp_ref, yt_ref, out_ref, *,
                    one_minus_p, two_minus_p, inv_1mp, inv_2mp,
                    log_eps, tile_rows, lanes, valid_rows, need_mask):
    i = pl.program_id(0)

    # Load native-dtype tiles; compute in f32 (v5e has no bf16 VPU/EUP).
    x = yp_ref[...].astype(jnp.float32)       # (tile_rows, lanes)
    yt = yt_ref[...].astype(jnp.float32)      # (tile_rows, lanes)

    # log-space clamp:  max(exp(x), eps) == exp(max(x, log(eps)))
    xc = jnp.maximum(x, jnp.float32(log_eps))

    # term1 = -exp(y_true) * yp^(1-p) / (1-p) == -exp(y_true + (1-p)*xc) * inv_1mp
    # term2 =  yp^(2-p) / (2-p)               ==  exp((2-p)*xc)          * inv_2mp
    term1 = -jnp.exp(yt + jnp.float32(one_minus_p) * xc) * jnp.float32(inv_1mp)
    term2 = jnp.exp(jnp.float32(two_minus_p) * xc) * jnp.float32(inv_2mp)
    loss = term1 + term2

    def _reduce(v):
        # (tile_rows, lanes) -> (8, lanes) partial: vreg-aligned sublane-group
        # adds on the VPU only (no cross-lane XLU reduce, no SMEM scalars).
        return v.reshape(tile_rows // 8, 8, lanes).sum(axis=0)

    if need_mask:
        # Only the last grid step can contain rows past the end of the array
        # (ragged last block -> undefined VMEM contents).  Pay for the iota /
        # compare / select only there; all other tiles take the cheap path.
        last = pl.num_programs(0) - 1

        @pl.when(i != last)
        def _():
            out_ref[0] = _reduce(loss)

        @pl.when(i == last)
        def _():
            row = (lax.broadcasted_iota(jnp.int32, (tile_rows, lanes), 0)
                   + i * tile_rows)
            out_ref[0] = _reduce(
                jnp.where(row < jnp.int32(valid_rows), loss, jnp.float32(0.0)))
    else:
        out_ref[0] = _reduce(loss)


def tweedie_loss(y_pred, y_true, p=1.5, eps=1e-8, tile_rows=4096, lanes=128):
    assert y_pred.shape == y_true.shape
    assert p != 1.0 and p != 2.0  # analytic pad correction / formula precondition
    n_total = y_pred.size
    assert n_total > 0

    one_minus_p = float(1.0 - p)
    two_minus_p = float(2.0 - p)
    inv_1mp = float(1.0 / (1.0 - p))
    inv_2mp = float(1.0 / (2.0 - p))
    log_eps = float(math.log(eps))

    # Flatten in the native wire dtype (no wrapper-side upcast / extra traffic).
    yp_flat = y_pred.reshape(-1)
    yt_flat = y_true.reshape(-1)

    # Common case (n_total % 128 == 0): zero-copy reshape to (rows, 128).
    # Rare case: pad <128 zeros (one small copy); zero-padded elements each
    # contribute exactly (inv_2mp - inv_1mp) (x=0 -> xc=0, y_true=0), which is
    # subtracted analytically below.
    pad = (-n_total) % lanes
    if pad:
        yp_flat = jnp.pad(yp_flat, (0, pad))
        yt_flat = jnp.pad(yt_flat, (0, pad))
    rows = (n_total + pad) // lanes

    # Tile sizing: large tiles amortize the ~0.35us/step overhead, but cap so
    # the grid has ~4+ steps (megacore sharding across v7x's 2 TensorCores).
    # f32 @ 4096 rows: 2 inputs x 2 bufs x 2 MiB = 8 MiB, within default scoped
    # VMEM on v5e/v6e/v7x (raise vmem_limit_bytes if you sweep tile_rows up).
    quarter = (((rows + 3) // 4 + 7) // 8) * 8
    tile_rows = max(8, (min(tile_rows, quarter) // 8) * 8)
    num_tiles = (rows + tile_rows - 1) // tile_rows
    need_mask = (rows % tile_rows) != 0

    yp2d = yp_flat.reshape(rows, lanes)
    yt2d = yt_flat.reshape(rows, lanes)

    kernel = functools.partial(
        _tweedie_kernel,
        one_minus_p=one_minus_p, two_minus_p=two_minus_p,
        inv_1mp=inv_1mp, inv_2mp=inv_2mp, log_eps=log_eps,
        tile_rows=tile_rows, lanes=lanes,
        valid_rows=rows, need_mask=need_mask)

    itemsize = jnp.dtype(y_pred.dtype).itemsize
    cost = pl.CostEstimate(
        flops=6 * rows * lanes,
        transcendentals=2 * rows * lanes,
        bytes_accessed=2 * rows * lanes * itemsize + num_tiles * 8 * lanes * 4)

    partials = pl.pallas_call(
        kernel,
        out_shape=jax.ShapeDtypeStruct((num_tiles, 8, lanes), jnp.float32),
        grid_spec=pltpu.PrefetchScalarGridSpec(
            num_scalar_prefetch=0,
            grid=(num_tiles,),
            in_specs=[
                pl.BlockSpec((tile_rows, lanes), lambda i: (i, 0)),
                pl.BlockSpec((tile_rows, lanes), lambda i: (i, 0)),
            ],
            out_specs=pl.BlockSpec((1, 8, lanes), lambda i: (i, 0, 0)),
        ),
        compiler_params=pltpu.CompilerParams(
            dimension_semantics=("parallel",),
        ),
        cost_estimate=cost,
    )(yp2d, yt2d)

    # Tiny final reduction (num_tiles x 8 x 128 f32) + mean in plain JAX.
    total = jnp.sum(partials)
    if pad:
        total = total - jnp.float32(pad * (inv_2mp - inv_1mp))
    return total / jnp.float32(n_total)


def tweedie_loss_ref(y_pred, y_true, p=1.5, eps=1e-8):
    yp = jnp.exp(y_pred.astype(jnp.float32))
    yp = jnp.maximum(yp, jnp.float32(eps))
    t1 = -jnp.exp(y_true.astype(jnp.float32)) * jnp.power(yp, 1.0 - p) / (1.0 - p)
    t2 = jnp.power(yp, 2.0 - p) / (2.0 - p)
    return jnp.mean(t1 + t2)


if __name__ == "__main__":
    key = jax.random.PRNGKey(0)
    k1, k2, k3, k4 = jax.random.split(key, 4)

    # Main shape implied by the module: NCHW-like (batch=2, channels=4, 16x16).
    shape = (2, 4, 16, 16)
    y_pred = jax.random.normal(k1, shape, dtype=jnp.float32) * 0.5
    y_true = jax.random.normal(k2, shape, dtype=jnp.float32) * 0.5
    loss = jax.block_until_ready(tweedie_loss(y_pred, y_true))
    ref = tweedie_loss_ref(y_pred, y_true)
    assert jnp.allclose(loss, ref, rtol=1e-5, atol=1e-5), (loss, ref)

    # Awkward size: exercises the ragged-last-block mask and the <128-element
    # zero-pad analytic correction.
    shape2 = (5, 300)
    yp2 = jax.random.normal(k3, shape2, dtype=jnp.float32) * 0.5
    yt2 = jax.random.normal(k4, shape2, dtype=jnp.float32) * 0.5
    loss2 = jax.block_until_ready(tweedie_loss(yp2, yt2))
    ref2 = tweedie_loss_ref(yp2, yt2)
    assert jnp.allclose(loss2, ref2, rtol=1e-5, atol=1e-5), (loss2, ref2)

    print("KERNEL_OK")
</pallas_src>

<mosaic_0001>
module attributes {stable_mosaic.version = 11 : i64} {
  func.func @_tweedie_kernel(%arg0: i32, %arg1: memref<8x128xf32, #tpu.memory_space<vmem>>, %arg2: memref<8x128xf32, #tpu.memory_space<vmem>>, %arg3: memref<1x8x128xf32, #tpu.memory_space<vmem>>) attributes {dimension_semantics = [#tpu.dimension_semantics<parallel>], iteration_bounds = array<i64: 2>, scalar_prefetch = 0 : i64, scratch_operands = 0 : i64, tpu.core_type = #tpu.core_type<tc>, window_params = [{transform_indices = @transform_0, window_bounds = array<i64: 8, 128>}, {transform_indices = @transform_1, window_bounds = array<i64: 8, 128>}, {transform_indices = @transform_2, window_bounds = array<i64: 1, 8, 128>}]} {
    %c0 = arith.constant 0 : index
    %c0_0 = arith.constant 0 : index
    %0 = vector.load %arg1[%c0, %c0_0] : memref<8x128xf32, #tpu.memory_space<vmem>>, vector<8x128xf32>
    %c0_1 = arith.constant 0 : index
    %c0_2 = arith.constant 0 : index
    %1 = vector.load %arg2[%c0_1, %c0_2] : memref<8x128xf32, #tpu.memory_space<vmem>>, vector<8x128xf32>
    %cst = arith.constant -18.420681 : f32
    %2 = vector.broadcast %cst : f32 to vector<8x128xf32>
    %3 = arith.maximumf %0, %2 : vector<8x128xf32>
    %cst_3 = arith.constant -5.000000e-01 : f32
    %4 = vector.broadcast %cst_3 : f32 to vector<8x128xf32>
    %5 = arith.mulf %4, %3 : vector<8x128xf32>
    %6 = arith.addf %1, %5 : vector<8x128xf32>
    %7 = math.exp %6 : vector<8x128xf32>
    %cst_4 = arith.constant 0.000000e+00 : f32
    %8 = vector.broadcast %cst_4 : f32 to vector<8x128xf32>
    %9 = arith.subf %8, %7 : vector<8x128xf32>
    %cst_5 = arith.constant -2.000000e+00 : f32
    %10 = vector.broadcast %cst_5 : f32 to vector<8x128xf32>
    %11 = arith.mulf %9, %10 : vector<8x128xf32>
    %cst_6 = arith.constant 5.000000e-01 : f32
    %12 = vector.broadcast %cst_6 : f32 to vector<8x128xf32>
    %13 = arith.mulf %12, %3 : vector<8x128xf32>
    %14 = math.exp %13 : vector<8x128xf32>
    %cst_7 = arith.constant 2.000000e+00 : f32
    %15 = vector.broadcast %cst_7 : f32 to vector<8x128xf32>
    %16 = arith.mulf %14, %15 : vector<8x128xf32>
    %17 = arith.addf %11, %16 : vector<8x128xf32>
    %18 = vector.shape_cast %17 : vector<8x128xf32> to vector<1x8x128xf32>
    %cst_8 = arith.constant dense<0.000000e+00> : vector<8x128xf32>
    %19 = vector.multi_reduction <add>, %18, %cst_8 [0] : vector<1x8x128xf32> to vector<8x128xf32>
    %c0_9 = arith.constant 0 : index
    %c0_10 = arith.constant 0 : index
    %c0_11 = arith.constant 0 : index
    %20 = vector.load %arg3[%c0_9, %c0_10, %c0_11] : memref<1x8x128xf32, #tpu.memory_space<vmem>>, vector<1x8x128xf32>
    %21 = vector.shape_cast %20 : vector<1x8x128xf32> to vector<8x128xf32>
    %22 = vector.shape_cast %19 : vector<8x128xf32> to vector<1x8x128xf32>
    tpu.vector_store %arg3[%c0_9, %c0_10, %c0_11], %22 {strides = array<i32>} : memref<1x8x128xf32, #tpu.memory_space<vmem>>, vector<1x8x128xf32>,
    return
  }
  func.func @transform_0(%arg0: i32) -> (i32, i32) {
    %c0_i32 = arith.constant 0 : i32
    %c0_i32_0 = arith.constant 0 : i32
    return %arg0, %c0_i32 : i32, i32
  }
  func.func @transform_1(%arg0: i32) -> (i32, i32) {
    %c0_i32 = arith.constant 0 : i32
    %c0_i32_0 = arith.constant 0 : i32
    return %arg0, %c0_i32 : i32, i32
  }
  func.func @transform_2(%arg0: i32) -> (i32, i32, i32) {
    %c0_i32 = arith.constant 0 : i32
    %c0_i32_0 = arith.constant 0 : i32
    %c0_i32_1 = arith.constant 0 : i32
    return %arg0, %c0_i32, %c0_i32_0 : i32, i32, i32
  }
}

</mosaic_0001>

<llo_original>
// kernel: tpu_custom_call.1
$region0: #{tpu_custom_call.1}
  #allocation0 [shape = 'u32[]', space=smem, size = 0x4, offset = 0x4, fixed_abs, tag = 'smem constant byte address 0x4 - core index']
  #allocation1 [shape = 'u32[144,128]{1,0:T(1,128)}', space=vmem, size = 0x12000, scoped, tag = 'internal scratch']
  %s0 = inlined_call_operand.hbm [shape: f32[16,128], index: 0, kind: input, shape index: {}]
  %s1 = inlined_call_operand.hbm [shape: f32[16,128], index: 1, kind: input, shape index: {}]
  %s2 = inlined_call_operand.hbm [shape: f32[2,8,128], index: 2, kind: output, shape index: {}]
  %s3 = sld [smem:[#allocation0]]
  $region49: #{tpu_custom_call.1} parent=0
    _
  %s5 = ssub.s32 1, %s3
  %s6 = scalar_select 0, %s5, %s3
  $region1: #{tpu_custom_call.1} parent=0
    #allocation2 [shape = 'u8[8192]{0}', space=vmem, size = 0x2000, scoped, tag = 'input window, operand 0']
    #allocation3 [shape = 's32[2]{0}', space=sflag, size = 0x8, scoped, tag = 'scoped memory for tpu_custom_call.1']
    #allocation4 [shape = 's32[2]{0}', space=sflag, size = 0x8, scoped, tag = 'scoped memory for tpu_custom_call.1']
    #allocation5 [shape = 'u8[8192]{0}', space=vmem, size = 0x2000, scoped, tag = 'input window, operand 1']
    #allocation6 [shape = 's32[2]{0}', space=sflag, size = 0x8, scoped, tag = 'scoped memory for tpu_custom_call.1']
    #allocation7 [shape = 'u8[8192]{0}', space=vmem, size = 0x2000, scoped, tag = 'output window, operand 0']
    %7 = vsyncpa [#allocation3], 0
    %s8 = scalar_lea.sflag [#allocation3], 1
    %9 = vsyncpa %s8, 0
    %10 = vsyncpa [#allocation6], 0
    %s11 = scalar_lea.sflag [#allocation6], 1
    %12 = vsyncpa %s11, 0
    %13 = vsyncpa [#allocation4], 0
    %s14 = scalar_lea.sflag [#allocation4], 1
    %15 = vsyncpa %s14, 0
    loop: start=0, step=1, limit=4
    $region2: #{tpu_custom_call.1} parent=1 // loop_pre_header
      _
    $region3: #{tpu_custom_call.1} parent=1 // loop_header
      %s17 = sphi 0, %s21
      %p18 = scmp.ge.s32.totalorder %s17, 4
      %s27 = sphi 0, %s29
      %s30 = sphi 0, %s27
      %s31 = sphi 0, %s30
      %s47 = sphi 0, %s31
      %s53 = sphi 0, %s55
      %s56 = sphi 0, %s53
      %s57 = sphi 0, %s56
      %s73 = sphi 0, %s57
      %s79 = sphi 0, %s81
      %s82 = sphi 0, %s79
      %s83 = sphi 0, %s82
      %s99 = sphi 0, %s83
    $region4: #{tpu_custom_call.1} parent=1 // loop_header_branch
      %20 = sbr.rel (%p18) target = $region8
    $region5: #{tpu_custom_call.1} parent=1 // loop_body
      %s22 = ssub.s32 %s17, 1
      %s23 = ssub.s32 %s17, 2
      %s24 = sadd.s32 %s17, 1
      %s25 = ssub.s32 %s17, %s24
      %p26 = scmp.eq.s32.totalorder %s25, 0
      %s28 = sadd.s32 %s27, 1
      %s29 = scalar_select %p26, %s27, %s28
      %p32 = pneg %p26
      %p33 = scmp.eq.s32.totalorder %s17, 1
      %p34 = por %p32, %p33
      %p35 = scmp.ne.s32.totalorder %s27, %s30
      %p36 = scmp.eq.s32.totalorder %s17, 0
      %p37 = por %p35, %p36
      %p38 = scmp.ne.s32.totalorder %s27, %s30
      %p39 = scmp.eq.s32.totalorder %s22, 1
      %p40 = por %p38, %p39
      %p41 = scmp.ne.s32.totalorder %s30, %s31
      %p42 = scmp.eq.s32.totalorder %s22, 0
      %p43 = por %p41, %p42
      %p44 = scmp.ne.s32.totalorder %s30, %s31
      %p45 = scmp.eq.s32.totalorder %s23, 1
      %p46 = por %p44, %p45
      %p48 = scmp.ne.s32.totalorder %s31, %s47
      %p49 = scmp.eq.s32.totalorder %s23, 0
      %p50 = por %p48, %p49
      %s51 = ssub.s32 %s17, %s24
      %p52 = scmp.eq.s32.totalorder %s51, 0
      %s54 = sadd.s32 %s53, 1
      %s55 = scalar_select %p52, %s53, %s54
      %p58 = pneg %p52
      %p59 = scmp.eq.s32.totalorder %s17, 1
      %p60 = por %p58, %p59
      %p61 = scmp.ne.s32.totalorder %s53, %s56
      %p62 = scmp.eq.s32.totalorder %s17, 0
      %p63 = por %p61, %p62
      %p64 = scmp.ne.s32.totalorder %s53, %s56
      %p65 = scmp.eq.s32.totalorder %s22, 1
      %p66 = por %p64, %p65
      %p67 = scmp.ne.s32.totalorder %s56, %s57
      %p68 = scmp.eq.s32.totalorder %s22, 0
      %p69 = por %p67, %p68
      %p70 = scmp.ne.s32.totalorder %s56, %s57
      %p71 = scmp.eq.s32.totalorder %s23, 1
      %p72 = por %p70, %p71
      %p74 = scmp.ne.s32.totalorder %s57, %s73
      %p75 = scmp.eq.s32.totalorder %s23, 0
      %p76 = por %p74, %p75
      %s77 = ssub.s32 %s17, %s24
      %p78 = scmp.eq.s32.totalorder %s77, 0
      %s80 = sadd.s32 %s79, 1
      %s81 = scalar_select %p78, %s79, %s80
      %p84 = pneg %p78
      %p85 = scmp.eq.s32.totalorder %s17, 1
      %p86 = por %p84, %p85
      %p87 = scmp.ne.s32.totalorder %s79, %s82
      %p88 = scmp.eq.s32.totalorder %s17, 0
      %p89 = por %p87, %p88
      %p90 = scmp.ne.s32.totalorder %s79, %s82
      %p91 = scmp.eq.s32.totalorder %s22, 1
      %p92 = por %p90, %p91
      %p93 = scmp.ne.s32.totalorder %s82, %s83
      %p94 = scmp.eq.s32.totalorder %s22, 0
      %p95 = por %p93, %p94
      %p96 = scmp.ne.s32.totalorder %s82, %s83
      %p97 = scmp.eq.s32.totalorder %s23, 1
      %p98 = por %p96, %p97
      %p100 = scmp.ne.s32.totalorder %s83, %s99
      %p101 = scmp.eq.s32.totalorder %s23, 0
      %p102 = por %p100, %p101
      %p103 = scmp.le.s32.totalorder 1, %s17
      %p104 = scmp.lt.s32.totalorder %s17, 3
      %p105 = pnand %p103, %p104
      %p106 = pneg %p105
      // Predicated region
      $region9: #{tpu_custom_call.1} parent=5 // pred_check
        _
      $region10: #{tpu_custom_call.1} parent=5 // pred_check_branch
        %108 = sbr.rel (%p105) target = $region12
      $region11: #{tpu_custom_call.1} parent=5 // pred_region
        %s109 = ssub.s32 %s17, 1
      $region12: #{tpu_custom_call.1} parent=5 // pred_fallthru
        _
      %p110 = scmp.lt.s32.totalorder %s17, 2
      // Predicated region
      $region13: #{tpu_custom_call.1} parent=5 // pred_check
        %p111 = pneg %p110
      $region14: #{tpu_custom_call.1} parent=5 // pred_check_branch
        %113 = sbr.rel (%p111) target = $region16
      $region15: #{tpu_custom_call.1} parent=5 // pred_region
        // Predicated region
        $region17: #{tpu_custom_call.1} parent=15 // pred_check
          %p114 = pneg %p37
        $region18: #{tpu_custom_call.1} parent=15 // pred_check_branch
          %116 = sbr.rel (%p114) target = $region20
        $region19: #{tpu_custom_call.1} parent=15 // pred_region
          %s117 = sand.u32 %s27, 1
          %s118 = scalar_lea.sflag [#allocation3], %s117
          %s119 = sand.u32 %s27, 1
          %s120 = smul.addr %s119, 8
          %s121 = scalar_lea.vmem [#allocation2], %s120
          %s123 = ssub.s32 128, 128
          %124 = vsyncadd %s118, %s123
          %s125 = smul.addr %s17, 128
          %s126 = scalar_lea.hbm %s0, %s125
          %s128 = sshll.u32 %s121, 4
          %s129 = int_to_ptr.vmem [resolvable:$true] %s128
          %131 = dma.hbm_to_vmem [thread:$0]  %s126, 128, %s129, %s118
        $region20: #{tpu_custom_call.1} parent=15 // pred_fallthru
          _
        // Predicated region
        $region21: #{tpu_custom_call.1} parent=15 // pred_check
          %p132 = pneg %p63
        $region22: #{tpu_custom_call.1} parent=15 // pred_check_branch
          %134 = sbr.rel (%p132) target = $region24
        $region23: #{tpu_custom_call.1} parent=15 // pred_region
          %s135 = sand.u32 %s53, 1
          %s136 = scalar_lea.sflag [#allocation6], %s135
          %s137 = sand.u32 %s53, 1
          %s138 = smul.addr %s137, 8
          %s139 = scalar_lea.vmem [#allocation5], %s138
          %s141 = ssub.s32 128, 128
          %142 = vsyncadd %s136, %s141
          %s143 = smul.addr %s17, 128
          %s144 = scalar_lea.hbm %s1, %s143
          %s146 = sshll.u32 %s139, 4
          %s147 = int_to_ptr.vmem [resolvable:$true] %s146
          %149 = dma.hbm_to_vmem [thread:$0]  %s144, 128, %s147, %s136
        $region24: #{tpu_custom_call.1} parent=15 // pred_fallthru
          _
      $region16: #{tpu_custom_call.1} parent=5 // pred_fallthru
        _
      %p150 = scmp.le.s32.totalorder 1, %s17
      %p151 = scmp.lt.s32.totalorder %s17, 3
      %p152 = pnand %p150, %p151
      %p153 = pneg %p152
      // Predicated region
      $region25: #{tpu_custom_call.1} parent=5 // pred_check
        _
      $region26: #{tpu_custom_call.1} parent=5 // pred_check_branch
        %155 = sbr.rel (%p152) target = $region28
      $region27: #{tpu_custom_call.1} parent=5 // pred_region
        %s156 = ssub.s32 %s17, 1
        %s157 = sand.u32 %s30, 1
        %s158 = scalar_lea.sflag [#allocation3], %s157
        %s159 = sand.u32 %s30, 1
        %s160 = smul.addr %s159, 8
        %s161 = scalar_lea.vmem [#allocation2], %s160
        // Predicated region
        $region29: #{tpu_custom_call.1} parent=27 // pred_check
          %p162 = pneg %p43
        $region30: #{tpu_custom_call.1} parent=27 // pred_check_branch
          %164 = sbr.rel (%p162) target = $region32
        $region31: #{tpu_custom_call.1} parent=27 // pred_region
          %165 = dma.done %s158, 128
        $region32: #{tpu_custom_call.1} parent=27 // pred_fallthru
          _
        %s166 = sand.u32 %s56, 1
        %s167 = scalar_lea.sflag [#allocation6], %s166
        %s168 = sand.u32 %s56, 1
        %s169 = smul.addr %s168, 8
        %s170 = scalar_lea.vmem [#allocation5], %s169
        // Predicated region
        $region33: #{tpu_custom_call.1} parent=27 // pred_check
          %p171 = pneg %p69
        $region34: #{tpu_custom_call.1} parent=27 // pred_check_branch
          %173 = sbr.rel (%p171) target = $region36
        $region35: #{tpu_custom_call.1} parent=27 // pred_region
          %174 = dma.done %s167, 128
        $region36: #{tpu_custom_call.1} parent=27 // pred_fallthru
          _
        %s175 = sand.u32 %s30, 1
        %s176 = scalar_lea.sflag [#allocation3], %s175
        %s177 = sand.u32 %s30, 1
        %s178 = smul.addr %s177, 8
        %s179 = scalar_lea.vmem [#allocation2], %s178
        %p180 = pneg %p43
        %p181 = pneg %p40
        %s182 = sand.u32 %s56, 1
        %s183 = scalar_lea.sflag [#allocation6], %s182
        %s184 = sand.u32 %s56, 1
        %s185 = smul.addr %s184, 8
        %s186 = scalar_lea.vmem [#allocation5], %s185
        %p187 = pneg %p69
        %p188 = pneg %p66
        %p189 = pneg %p95
        %p190 = pneg %p92
        %s191 = sand.u32 %s82, 1
        %s192 = scalar_lea.sflag [#allocation4], %s191
        %s193 = sand.u32 %s82, 1
        %s194 = smul.addr %s193, 8
        %s195 = scalar_lea.vmem [#allocation7], %s194
        %v196 = vld [vmem:[%s161] sm:$0xff]
        %v197 = vld [vmem:[%s170] sm:$0xff]
        %v198 = vmax.f32 %v196, -18.420681
        %v199 = vmul.f32 %v198, -0.5
        %v200 = vadd.f32 %v197, %v199
        %v201 = vmul.f32 %v200, 1.442695
        %v202 = vpow.pop %v201
        %v203 = vsub.f32 0.0, %v202
        %v204 = vmul.f32 %v203, -2.0
        %v205 = vmul.f32 %v198, 0.5
        %v206 = vmul.f32 %v205, 1.442695
        %v207 = vpow.pop %v206
        %v208 = vmul.f32 %v207, 2.0
        %v209 = vadd.f32 %v204, %v208
        %v210 = vadd.f32 %v209, 0.0
        %211 = vst [vmem:[%s195] sm:$0xff] %v210
        %s212 = sand.u32 %s82, 1
        %s213 = scalar_lea.sflag [#allocation4], %s212
        %s214 = sand.u32 %s82, 1
        %s215 = smul.addr %s214, 8
        %s216 = scalar_lea.vmem [#allocation7], %s215
        // Predicated region
        $region37: #{tpu_custom_call.1} parent=27 // pred_check
          %p217 = pneg %p92
        $region38: #{tpu_custom_call.1} parent=27 // pred_check_branch
          %219 = sbr.rel (%p217) target = $region40
        $region39: #{tpu_custom_call.1} parent=27 // pred_region
          %s221 = ssub.s32 128, 128
          %222 = vsyncadd %s213, %s221
          %s223 = smul.addr %s22, 128
          %s224 = scalar_lea.hbm %s2, %s223
          %s226 = sshll.u32 %s216, 4
          %s227 = int_to_ptr.vmem [resolvable:$true] %s226
          %229 = dma.vmem_to_hbm [thread:$0]  %s227, 128, %s224, %s213
        $region40: #{tpu_custom_call.1} parent=27 // pred_fallthru
          _
      $region28: #{tpu_custom_call.1} parent=5 // pred_fallthru
        _
      %p230 = scmp.le.s32.totalorder 2, %s17
      // Predicated region
      $region41: #{tpu_custom_call.1} parent=5 // pred_check
        %p231 = pneg %p230
      $region42: #{tpu_custom_call.1} parent=5 // pred_check_branch
        %233 = sbr.rel (%p231) target = $region44
      $region43: #{tpu_custom_call.1} parent=5 // pred_region
        %s234 = ssub.s32 %s17, 2
        // Predicated region
        $region45: #{tpu_custom_call.1} parent=43 // pred_check
          %p235 = pneg %p98
        $region46: #{tpu_custom_call.1} parent=43 // pred_check_branch
          %237 = sbr.rel (%p235) target = $region48
        $region47: #{tpu_custom_call.1} parent=43 // pred_region
          %s238 = sand.u32 %s83, 1
          %s239 = scalar_lea.sflag [#allocation4], %s238
          %s240 = sand.u32 %s83, 1
          %s241 = smul.addr %s240, 8
          %s242 = scalar_lea.vmem [#allocation7], %s241
          %243 = dma.done %s239, 128
        $region48: #{tpu_custom_call.1} parent=43 // pred_fallthru
          _
      $region44: #{tpu_custom_call.1} parent=5 // pred_fallthru
        _
    $region6: #{tpu_custom_call.1} parent=1 // loop_footer
      %s21 = sadd.s32 1, %s17
    $region7: #{tpu_custom_call.1} parent=1 // loop_footer_branch
      %16 = sbr.rel target = $region3
    $region8: #{tpu_custom_call.1} parent=1 // loop_exit
      _
    %244 = vsyncpa [#allocation3], 1
    %s245 = scalar_lea.sflag [#allocation3], 1
    %246 = vsyncpa %s245, 1
    %247 = vsyncpa [#allocation6], 1
    %s248 = scalar_lea.sflag [#allocation6], 1
    %249 = vsyncpa %s248, 1
    %250 = vsyncpa [#allocation4], 1
    %s251 = scalar_lea.sflag [#allocation4], 1
    %252 = vsyncpa %s251, 1

</llo_original>
